<compile_context>
chip_gen: v5e
topology: v5e:2x2
jax: 0.10.0
libtpu: 0.0.40
codegen_flags: <defaults>
</compile_context>

<pallas_src>
import numpy as np
import jax
import jax.numpy as jnp
from jax.experimental import pallas as pl
from jax.experimental.pallas import tpu as pltpu


def _adaptive_pool_matrix(L_in: int, L_out: int) -> jnp.ndarray:
    """Row-stochastic matrix P (L_out, L_in) s.t. P @ x == AdaptiveAvgPool1d(L_out)(x)."""
    P = np.zeros((L_out, L_in), dtype=np.float32)
    for k in range(L_out):
        start = (k * L_in) // L_out
        end = -((-(k + 1) * L_in) // L_out)  # ceil((k+1)*L_in / L_out)
        P[k, start:end] = 1.0 / float(end - start)
    return jnp.asarray(P)


def _ape_kernel(grid2d_ref, depth_ref, out_ref):
    """One grid step = one batch tile.  Pure broadcast-add + lane-dense store.

    grid2d_ref: VMEM (S, S*D)      batch-invariant rows+cols position grid
    depth_ref : VMEM (TB, 1, S*D)  per-batch depth embedding, pre-tiled along lanes
    out_ref   : VMEM (TB, S, S*D)  output block for this batch tile
    """
    out_ref[...] = (depth_ref[...] + grid2d_ref[...][None, :, :]).astype(out_ref.dtype)


def _pick_batch_tile(B: int, bytes_per_batch_row: int) -> int:
    """Largest batch tile that (a) fits a conservative VMEM budget with the
    BlockSpec double-buffer, (b) keeps >= 2 grid steps when B >= 2 (v7x has
    2 TensorCores and 'parallel' shards the grid across them), (c) divides B."""
    budget = 8 * 1024 * 1024  # well inside the default scoped VMEM on v5e/v6e/v7x
    tb = max(1, min(B, budget // (2 * bytes_per_batch_row)))
    if B >= 2:
        tb = min(tb, max(1, B // 2))
    while B % tb != 0:
        tb -= 1
    return tb


def adaptive_position_embedding(pos_embed, size, z_direction_position):
    """pos_embed: (1, max_length, D); size: (H, W); z: (B, 1) or (B,) int."""
    pos = pos_embed.reshape(pos_embed.shape[-2], pos_embed.shape[-1])  # (L, D)
    L, D = pos.shape
    S0, S1 = int(size[0]), int(size[1])
    assert S0 == S1, "shapes only broadcast-compatible for size[0] == size[1]"
    assert S0 < L, "only the adaptive-pool branch (size < max_length) is implemented"
    S = S0

    # Clamp depth indices: an OOB index would otherwise silently gather junk.
    z_idx = jnp.clip(
        jnp.asarray(z_direction_position).reshape(-1).astype(jnp.int32), 0, L - 1)
    B = int(z_idx.shape[0])

    # ---- batch-invariant work, hoisted out of the grid (plain-JAX, done once) ----
    # S0 == S1  =>  a single pooled tensor serves both rows and columns.
    P = _adaptive_pool_matrix(L, S)                                 # (S, L)
    pooled = jnp.dot(P, pos.astype(jnp.float32),
                     preferred_element_type=jnp.float32)            # (S, D)
    # grid2d[i, j*D + d] = cols_pos[i, d] + rows_pos[j, d]   (lane-dense layout)
    grid2d = (pooled[:, None, :] + pooled[None, :, :]).reshape(S, S * D)
    grid2d = grid2d.astype(pos.dtype)                               # (S, S*D)

    # ---- per-batch depth rows: tiny gather + lane tile, also wrapper-side --------
    depth = jnp.take(pos, z_idx, axis=0)                            # (B, D)
    depth_tiled = jnp.tile(depth, (1, S)).reshape(B, 1, S * D)      # (B, 1, S*D)

    TB = _pick_batch_tile(B, S * S * D * pos.dtype.itemsize)

    out = pl.pallas_call(
        _ape_kernel,
        out_shape=jax.ShapeDtypeStruct((B, S, S * D), pos.dtype),
        grid=(B // TB,),
        in_specs=[
            pl.BlockSpec((S, S * D), lambda bt: (0, 0)),        # constant grid2d
            pl.BlockSpec((TB, 1, S * D), lambda bt: (bt, 0, 0)),  # per-tile depth rows
        ],
        out_specs=pl.BlockSpec((TB, S, S * D), lambda bt: (bt, 0, 0)),
        compiler_params=pltpu.CompilerParams(dimension_semantics=("parallel",)),
    )(grid2d, depth_tiled)

    # (B, S, S*D) row-major == (B*S*S, D) row-major — free reshape.
    return out.reshape(B * S * S, D)


def _reference(pos_embed, size, z_direction_position):
    """Pure-JAX mirror of the PyTorch forward (pooled branch)."""
    pos = pos_embed.reshape(pos_embed.shape[-2], pos_embed.shape[-1])
    L, D = pos.shape
    S0, S1 = int(size[0]), int(size[1])
    rows_pos = _adaptive_pool_matrix(L, S0) @ pos                 # (S0, D)
    cols_pos = _adaptive_pool_matrix(L, S1) @ pos                 # (S1, D)
    rows_dir = jnp.tile(rows_pos, (S0, 1))                        # 'b l d -> b (n l) d'
    cols_dir = jnp.repeat(cols_pos, S1, axis=0)                   # 'b l d -> b (l n) d'
    z = jnp.asarray(z_direction_position).reshape(-1)
    depth = pos[z]                                                # gather along length
    out = depth[:, None, :] + rows_dir[None] + cols_dir[None]     # (B, S*S, D)
    return out.reshape(-1, D)


if __name__ == "__main__":
    key = jax.random.PRNGKey(0)
    k_pos, k_z = jax.random.split(key)

    max_length = 16
    embed_dim = 32
    B = 2
    size = (8, 8)                                   # H == W < max_length

    # Deterministic parameter init (the nn.Parameter of shape (1, L, D)).
    pos_embed = jax.random.normal(k_pos, (1, max_length, embed_dim), dtype=jnp.float32)
    # Depth indices, shaped (B, 1) like the PyTorch caller.
    z_direction_position = jax.random.randint(k_z, (B, 1), 0, max_length, dtype=jnp.int32)

    out = adaptive_position_embedding(pos_embed, size, z_direction_position)
    out = jax.block_until_ready(out)

    ref = _reference(pos_embed, size, z_direction_position)
    np.testing.assert_allclose(np.asarray(out), np.asarray(ref), rtol=1e-4, atol=1e-5)
    assert out.shape == (B * size[0] * size[1], embed_dim)

    print("KERNEL_OK")
</pallas_src>

<mosaic_0001>
module attributes {stable_mosaic.version = 11 : i64} {
  func.func @_ape_kernel(%arg0: i32, %arg1: memref<8x256xf32, #tpu.memory_space<vmem>>, %arg2: memref<1x1x256xf32, #tpu.memory_space<vmem>>, %arg3: memref<1x8x256xf32, #tpu.memory_space<vmem>>) attributes {dimension_semantics = [#tpu.dimension_semantics<parallel>], iteration_bounds = array<i64: 2>, scalar_prefetch = 0 : i64, scratch_operands = 0 : i64, tpu.core_type = #tpu.core_type<tc>, window_params = [{pipeline_mode = #tpu.pipeline_mode<synchronous>, transform_indices = @transform_0, window_bounds = array<i64: 8, 256>}, {transform_indices = @transform_1, window_bounds = array<i64: 1, 1, 256>}, {transform_indices = @transform_2, window_bounds = array<i64: 1, 8, 256>}]} {
    %c0 = arith.constant 0 : index
    %c0_0 = arith.constant 0 : index
    %c0_1 = arith.constant 0 : index
    %0 = vector.load %arg2[%c0, %c0_0, %c0_1] : memref<1x1x256xf32, #tpu.memory_space<vmem>>, vector<1x1x256xf32>
    %c0_2 = arith.constant 0 : index
    %c0_3 = arith.constant 0 : index
    %1 = vector.load %arg1[%c0_2, %c0_3] : memref<8x256xf32, #tpu.memory_space<vmem>>, vector<8x256xf32>
    %2 = vector.shape_cast %1 : vector<8x256xf32> to vector<1x8x256xf32>
    %3 = vector.broadcast %0 : vector<1x1x256xf32> to vector<1x8x256xf32>
    %4 = arith.addf %3, %2 : vector<1x8x256xf32>
    %c0_4 = arith.constant 0 : index
    %c0_5 = arith.constant 0 : index
    %c0_6 = arith.constant 0 : index
    %5 = vector.load %arg3[%c0_4, %c0_5, %c0_6] : memref<1x8x256xf32, #tpu.memory_space<vmem>>, vector<1x8x256xf32>
    tpu.vector_store %arg3[%c0_4, %c0_5, %c0_6], %4 {strides = array<i32>} : memref<1x8x256xf32, #tpu.memory_space<vmem>>, vector<1x8x256xf32>,
    return
  }
  func.func @transform_0(%arg0: i32) -> (i32, i32) {
    %c0_i32 = arith.constant 0 : i32
    %c0_i32_0 = arith.constant 0 : i32
    %c0_i32_1 = arith.constant 0 : i32
    return %c0_i32, %c0_i32_0 : i32, i32
  }
  func.func @transform_1(%arg0: i32) -> (i32, i32, i32) {
    %c0_i32 = arith.constant 0 : i32
    %c0_i32_0 = arith.constant 0 : i32
    %c0_i32_1 = arith.constant 0 : i32
    return %arg0, %c0_i32, %c0_i32_0 : i32, i32, i32
  }
  func.func @transform_2(%arg0: i32) -> (i32, i32, i32) {
    %c0_i32 = arith.constant 0 : i32
    %c0_i32_0 = arith.constant 0 : i32
    %c0_i32_1 = arith.constant 0 : i32
    return %arg0, %c0_i32, %c0_i32_0 : i32, i32, i32
  }
}

</mosaic_0001>

<llo_original>
// kernel: tpu_custom_call.1
$region0: #{tpu_custom_call.1}
  #allocation0 [shape = 'u32[]', space=smem, size = 0x4, offset = 0x4, fixed_abs, tag = 'smem constant byte address 0x4 - core index']
  #allocation1 [shape = 'u32[72,128]{1,0:T(1,128)}', space=vmem, size = 0x9000, scoped, tag = 'internal scratch']
  %s0 = inlined_call_operand.hbm [shape: f32[8,256], index: 0, kind: input, shape index: {}]
  %s1 = inlined_call_operand.hbm [shape: f32[2,1,256], index: 1, kind: input, shape index: {}]
  %s2 = inlined_call_operand.hbm [shape: f32[2,8,256], index: 2, kind: output, shape index: {}]
  %s3 = sld [smem:[#allocation0]]
  $region49: #{tpu_custom_call.1} parent=0
    _
  %s5 = ssub.s32 1, %s3
  %s6 = scalar_select 0, %s5, %s3
  $region1: #{tpu_custom_call.1} parent=0
    #allocation2 [shape = 'u8[8192]{0}', space=vmem, size = 0x2000, scoped, tag = 'input window, operand 0, single buffered']
    #allocation3 [shape = 's32[2]{0}', space=sflag, size = 0x8, scoped, tag = 'scoped memory for tpu_custom_call.1']
    #allocation4 [shape = 's32[2]{0}', space=sflag, size = 0x8, scoped, tag = 'scoped memory for tpu_custom_call.1']
    #allocation5 [shape = 'u8[2048]{0}', space=vmem, size = 0x800, scoped, tag = 'input window, operand 1']
    #allocation6 [shape = 's32[2]{0}', space=sflag, size = 0x8, scoped, tag = 'scoped memory for tpu_custom_call.1']
    #allocation7 [shape = 'u8[16384]{0}', space=vmem, size = 0x4000, scoped, tag = 'output window, operand 0']
    %7 = vsyncpa [#allocation3], 0
    %8 = vsyncpa [#allocation6], 0
    %s9 = scalar_lea.sflag [#allocation6], 1
    %10 = vsyncpa %s9, 0
    %11 = vsyncpa [#allocation4], 0
    %s12 = scalar_lea.sflag [#allocation4], 1
    %13 = vsyncpa %s12, 0
    loop: start=0, step=1, limit=4
    $region2: #{tpu_custom_call.1} parent=1 // loop_pre_header
      _
    $region3: #{tpu_custom_call.1} parent=1 // loop_header
      %s15 = sphi 0, %s19
      %p16 = scmp.ge.s32.totalorder %s15, 4
      %s23 = sphi 0, %s23
      %s25 = sphi 0, %s23
      %s26 = sphi 0, %s25
      %s40 = sphi 0, %s26
      %s46 = sphi 0, %s48
      %s49 = sphi 0, %s46
      %s50 = sphi 0, %s49
      %s66 = sphi 0, %s50
      %s72 = sphi 0, %s74
      %s75 = sphi 0, %s72
      %s76 = sphi 0, %s75
      %s92 = sphi 0, %s76
    $region4: #{tpu_custom_call.1} parent=1 // loop_header_branch
      %18 = sbr.rel (%p16) target = $region8
    $region5: #{tpu_custom_call.1} parent=1 // loop_body
      %s20 = ssub.s32 %s15, 1
      %s21 = ssub.s32 %s15, 2
      %s22 = sadd.s32 %s15, 1
      %s24 = sadd.s32 %s23, 1
      %p27 = scmp.eq.s32.totalorder %s15, 1
      %p28 = scmp.ne.s32.totalorder %s23, %s25
      %p29 = scmp.eq.s32.totalorder %s15, 0
      %p30 = por %p28, %p29
      %p31 = scmp.ne.s32.totalorder %s23, %s25
      %p32 = scmp.eq.s32.totalorder %s20, 1
      %p33 = por %p31, %p32
      %p34 = scmp.ne.s32.totalorder %s25, %s26
      %p35 = scmp.eq.s32.totalorder %s20, 0
      %p36 = por %p34, %p35
      %p37 = scmp.ne.s32.totalorder %s25, %s26
      %p38 = scmp.eq.s32.totalorder %s21, 1
      %p39 = por %p37, %p38
      %p41 = scmp.ne.s32.totalorder %s26, %s40
      %p42 = scmp.eq.s32.totalorder %s21, 0
      %p43 = por %p41, %p42
      %s44 = ssub.s32 %s15, %s22
      %p45 = scmp.eq.s32.totalorder %s44, 0
      %s47 = sadd.s32 %s46, 1
      %s48 = scalar_select %p45, %s46, %s47
      %p51 = pneg %p45
      %p52 = scmp.eq.s32.totalorder %s15, 1
      %p53 = por %p51, %p52
      %p54 = scmp.ne.s32.totalorder %s46, %s49
      %p55 = scmp.eq.s32.totalorder %s15, 0
      %p56 = por %p54, %p55
      %p57 = scmp.ne.s32.totalorder %s46, %s49
      %p58 = scmp.eq.s32.totalorder %s20, 1
      %p59 = por %p57, %p58
      %p60 = scmp.ne.s32.totalorder %s49, %s50
      %p61 = scmp.eq.s32.totalorder %s20, 0
      %p62 = por %p60, %p61
      %p63 = scmp.ne.s32.totalorder %s49, %s50
      %p64 = scmp.eq.s32.totalorder %s21, 1
      %p65 = por %p63, %p64
      %p67 = scmp.ne.s32.totalorder %s50, %s66
      %p68 = scmp.eq.s32.totalorder %s21, 0
      %p69 = por %p67, %p68
      %s70 = ssub.s32 %s15, %s22
      %p71 = scmp.eq.s32.totalorder %s70, 0
      %s73 = sadd.s32 %s72, 1
      %s74 = scalar_select %p71, %s72, %s73
      %p77 = pneg %p71
      %p78 = scmp.eq.s32.totalorder %s15, 1
      %p79 = por %p77, %p78
      %p80 = scmp.ne.s32.totalorder %s72, %s75
      %p81 = scmp.eq.s32.totalorder %s15, 0
      %p82 = por %p80, %p81
      %p83 = scmp.ne.s32.totalorder %s72, %s75
      %p84 = scmp.eq.s32.totalorder %s20, 1
      %p85 = por %p83, %p84
      %p86 = scmp.ne.s32.totalorder %s75, %s76
      %p87 = scmp.eq.s32.totalorder %s20, 0
      %p88 = por %p86, %p87
      %p89 = scmp.ne.s32.totalorder %s75, %s76
      %p90 = scmp.eq.s32.totalorder %s21, 1
      %p91 = por %p89, %p90
      %p93 = scmp.ne.s32.totalorder %s76, %s92
      %p94 = scmp.eq.s32.totalorder %s21, 0
      %p95 = por %p93, %p94
      %p96 = scmp.le.s32.totalorder 1, %s15
      %p97 = scmp.lt.s32.totalorder %s15, 3
      %p98 = pnand %p96, %p97
      %p99 = pneg %p98
      // Predicated region
      $region9: #{tpu_custom_call.1} parent=5 // pred_check
        _
      $region10: #{tpu_custom_call.1} parent=5 // pred_check_branch
        %101 = sbr.rel (%p98) target = $region12
      $region11: #{tpu_custom_call.1} parent=5 // pred_region
        %s102 = ssub.s32 %s15, 1
        // Predicated region
        $region13: #{tpu_custom_call.1} parent=11 // pred_check
          %p103 = pneg %p36
        $region14: #{tpu_custom_call.1} parent=11 // pred_check_branch
          %105 = sbr.rel (%p103) target = $region16
        $region15: #{tpu_custom_call.1} parent=11 // pred_region
          %107 = vsyncadd [#allocation3], 0
          %s109 = sshll.u32 %s0, 4
          %s110 = int_to_ptr.hbm [resolvable:$true] %s109
          %s111 = sshll.u32 [#allocation2], 4
          %s112 = int_to_ptr.vmem [resolvable:$true] %s111
          %114 = dma.hbm_to_vmem [thread:$0]  %s110, 256, %s112, [#allocation3]
        $region16: #{tpu_custom_call.1} parent=11 // pred_fallthru
          _
      $region12: #{tpu_custom_call.1} parent=5 // pred_fallthru
        _
      %p115 = scmp.lt.s32.totalorder %s15, 2
      // Predicated region
      $region17: #{tpu_custom_call.1} parent=5 // pred_check
        %p116 = pneg %p115
      $region18: #{tpu_custom_call.1} parent=5 // pred_check_branch
        %118 = sbr.rel (%p116) target = $region20
      $region19: #{tpu_custom_call.1} parent=5 // pred_region
        // Predicated region
        $region21: #{tpu_custom_call.1} parent=19 // pred_check
          %p119 = pneg %p56
        $region22: #{tpu_custom_call.1} parent=19 // pred_check_branch
          %121 = sbr.rel (%p119) target = $region24
        $region23: #{tpu_custom_call.1} parent=19 // pred_region
          %s122 = sand.u32 %s46, 1
          %s123 = scalar_lea.sflag [#allocation6], %s122
          %s124 = sand.u32 %s46, 1
          %s125 = smul.addr %s124, 2
          %s126 = scalar_lea.vmem [#allocation5], %s125
          %128 = vsyncadd %s123, 0
          %s129 = smul.addr %s15, 2
          %s130 = scalar_lea.hbm %s1, %s129
          %s132 = sshll.u32 %s130, 4
          %s133 = int_to_ptr.hbm [resolvable:$true] %s132
          %s134 = sshll.u32 %s126, 4
          %s135 = int_to_ptr.vmem [resolvable:$true] %s134
          %137 = dma.hbm_to_vmem [thread:$0]  %s133, 32, %s135, %s123
        $region24: #{tpu_custom_call.1} parent=19 // pred_fallthru
          _
      $region20: #{tpu_custom_call.1} parent=5 // pred_fallthru
        _
      %p138 = scmp.le.s32.totalorder 1, %s15
      %p139 = scmp.lt.s32.totalorder %s15, 3
      %p140 = pnand %p138, %p139
      %p141 = pneg %p140
      // Predicated region
      $region25: #{tpu_custom_call.1} parent=5 // pred_check
        _
      $region26: #{tpu_custom_call.1} parent=5 // pred_check_branch
        %143 = sbr.rel (%p140) target = $region28
      $region27: #{tpu_custom_call.1} parent=5 // pred_region
        %s144 = ssub.s32 %s15, 1
        // Predicated region
        $region29: #{tpu_custom_call.1} parent=27 // pred_check
          %p145 = pneg %p36
        $region30: #{tpu_custom_call.1} parent=27 // pred_check_branch
          %147 = sbr.rel (%p145) target = $region32
        $region31: #{tpu_custom_call.1} parent=27 // pred_region
          %149 = dma.done [#allocation3], 256
        $region32: #{tpu_custom_call.1} parent=27 // pred_fallthru
          _
        %s150 = sand.u32 %s49, 1
        %s151 = scalar_lea.sflag [#allocation6], %s150
        %s152 = sand.u32 %s49, 1
        %s153 = smul.addr %s152, 2
        %s154 = scalar_lea.vmem [#allocation5], %s153
        // Predicated region
        $region33: #{tpu_custom_call.1} parent=27 // pred_check
          %p155 = pneg %p62
        $region34: #{tpu_custom_call.1} parent=27 // pred_check_branch
          %157 = sbr.rel (%p155) target = $region36
        $region35: #{tpu_custom_call.1} parent=27 // pred_region
          %159 = dma.done %s151, 32
        $region36: #{tpu_custom_call.1} parent=27 // pred_fallthru
          _
        %p160 = pneg %p36
        %p161 = pneg %p33
        %s162 = sand.u32 %s49, 1
        %s163 = scalar_lea.sflag [#allocation6], %s162
        %s164 = sand.u32 %s49, 1
        %s165 = smul.addr %s164, 2
        %s166 = scalar_lea.vmem [#allocation5], %s165
        %p167 = pneg %p62
        %p168 = pneg %p59
        %p169 = pneg %p88
        %p170 = pneg %p85
        %s171 = sand.u32 %s75, 1
        %s172 = scalar_lea.sflag [#allocation4], %s171
        %s173 = sand.u32 %s75, 1
        %s174 = smul.addr %s173, 16
        %s175 = scalar_lea.vmem [#allocation7], %s174
        %v176 = vld [vmem:[%s154] sm:$0x3]
        %v177 = vld [vmem:[#allocation2] sm:$0xff]
        %v178 = vld [vmem:[#allocation2 + $0x8] sm:$0xff]
        %v180 = vperm.slane %v176, 0
        %v181 = vperm.slane %v176, 1
        %v184 = vadd.f32 %v180, %v177
        %v185 = vadd.f32 %v181, %v178
        %186 = vst [vmem:[%s175] sm:$0xff] %v184
        %187 = vst [vmem:[%s175 + $0x8] sm:$0xff] %v185
        %s188 = sand.u32 %s75, 1
        %s189 = scalar_lea.sflag [#allocation4], %s188
        %s190 = sand.u32 %s75, 1
        %s191 = smul.addr %s190, 16
        %s192 = scalar_lea.vmem [#allocation7], %s191
        // Predicated region
        $region37: #{tpu_custom_call.1} parent=27 // pred_check
          %p193 = pneg %p85
        $region38: #{tpu_custom_call.1} parent=27 // pred_check_branch
          %195 = sbr.rel (%p193) target = $region40
        $region39: #{tpu_custom_call.1} parent=27 // pred_region
          %197 = vsyncadd %s189, 0
          %s198 = smul.addr %s20, 2
          %s199 = smul.addr %s198, 8
          %s200 = scalar_lea.hbm %s2, %s199
          %s202 = sshll.u32 %s192, 4
          %s203 = int_to_ptr.vmem [resolvable:$true] %s202
          %s204 = sshll.u32 %s200, 4
          %s205 = int_to_ptr.hbm [resolvable:$true] %s204
          %207 = dma.vmem_to_hbm [thread:$0]  %s203, 256, %s205, %s189
        $region40: #{tpu_custom_call.1} parent=27 // pred_fallthru
          _
      $region28: #{tpu_custom_call.1} parent=5 // pred_fallthru
        _
      %p208 = scmp.le.s32.totalorder 2, %s15
      // Predicated region
      $region41: #{tpu_custom_call.1} parent=5 // pred_check
        %p209 = pneg %p208
      $region42: #{tpu_custom_call.1} parent=5 // pred_check_branch
        %211 = sbr.rel (%p209) target = $region44
      $region43: #{tpu_custom_call.1} parent=5 // pred_region
        %s212 = ssub.s32 %s15, 2
        // Predicated region
        $region45: #{tpu_custom_call.1} parent=43 // pred_check
          %p213 = pneg %p91
        $region46: #{tpu_custom_call.1} parent=43 // pred_check_branch
          %215 = sbr.rel (%p213) target = $region48
        $region47: #{tpu_custom_call.1} parent=43 // pred_region
          %s216 = sand.u32 %s76, 1
          %s217 = scalar_lea.sflag [#allocation4], %s216
          %s218 = sand.u32 %s76, 1
          %s219 = smul.addr %s218, 16
          %s220 = scalar_lea.vmem [#allocation7], %s219
          %222 = dma.done %s217, 256
        $region48: #{tpu_custom_call.1} parent=43 // pred_fallthru
          _
      $region44: #{tpu_custom_call.1} parent=5 // pred_fallthru
        _
    $region6: #{tpu_custom_call.1} parent=1 // loop_footer
      %s19 = sadd.s32 1, %s15
    $region7: #{tpu_custom_call.1} parent=1 // loop_footer_branch
      %14 = sbr.rel target = $region3
    $region8: #{tpu_custom_call.1} parent=1 // loop_exit
      _
    %223 = vsyncpa [#allocation3], 1
    %s224 = scalar_lea.sflag [#allocation3], 1
    %225 = vsyncpa %s224, 1
    %226 = vsyncpa [#allocation6], 1
    %s227 = scalar_lea.sflag [#allocation6], 1
    %228 = vsyncpa %s227, 1
    %229 = vsyncpa [#allocation4], 1
    %s230 = scalar_lea.sflag [#allocation4], 1
    %231 = vsyncpa %s230, 1

</llo_original>
